<compile_context>
chip_gen: v5e
topology: v5e:2x2
jax: 0.10.0
libtpu: 0.0.40
codegen_flags: <defaults>
</compile_context>

<pallas_src>
import jax
import jax.numpy as jnp
from jax.experimental import pallas as pl
from jax.experimental.pallas import tpu as pltpu


_LANE = 128
_LANE_CAP = 8192          # max lane tile (multiple of 128)
_MIN_GRID_STEPS = 4       # keep the DMA pipeline busy / both v7x TCs fed


def _vmem_plan():
    """Per-buffer tile byte budget (and scoped-VMEM limit) keyed off the chip."""
    try:
        info = pltpu.get_tpu_info()
        vmem = int(getattr(info, "vmem_capacity_bytes", 0) or 0)
    except Exception:
        vmem = 0
    if 0 < vmem <= 80 * 1024 * 1024:
        # v7x-class: 64 MiB VMEM, ~3.2 TB/s HBM -> 4-8 MiB tiles pay off;
        # raise the scoped limit to cover 2x input + 2x output buffers.
        return 6 * 1024 * 1024, 48 << 20
    # v5e / v6e (128 MiB VMEM, 16/32 MiB default scoped limit): ~2 MiB tiles
    # already reach ~85-93% of the HBM roofline and fit the default limit.
    return 2 * 1024 * 1024, None


def _prelu_kernel(alpha_ref, x_ref, o_ref):
    # alpha_ref: (rb, 1) per-row slope column OR (1, lb) per-lane slope vector
    #            (float32), broadcast against the x block.
    # x_ref/o_ref: (rb, lb) block of the flattened input/output.
    x = x_ref[...]
    a = alpha_ref[...]
    # PReLU(x) = x if x > 0 else a * x.  Slope math in f32, cast back.
    neg = (a * x.astype(jnp.float32)).astype(x.dtype)
    o_ref[...] = jnp.where(x > 0, x, neg)


def _pick_tiles(rows, lanes, itemsize, sub, tile_bytes):
    # Lane tile first: lane-dense stores and long contiguous DMA bursts.
    lb = lanes if lanes <= _LANE_CAP else _LANE_CAP
    rb_budget = max(sub, (tile_bytes // (lb * itemsize)) // sub * sub)
    rb = rows if rows <= rb_budget else rb_budget

    # Avoid a degenerate 1-step grid (no pipelining, one idle v7x TC).
    gr, gl = pl.cdiv(rows, rb), pl.cdiv(lanes, lb)
    if gr * gl < _MIN_GRID_STEPS:
        if lanes >= 2 * _LANE:
            want = min(_MIN_GRID_STEPS, lanes // _LANE)
            lb = pl.cdiv(pl.cdiv(lanes, want), _LANE) * _LANE
            gl = pl.cdiv(lanes, lb)
        if gr * gl < _MIN_GRID_STEPS and rows >= 2 * sub:
            want = min(_MIN_GRID_STEPS, rows // sub)
            rb = pl.cdiv(pl.cdiv(rows, want), sub) * sub
    return rb, lb


def prelu_pallas(x, alpha):
    """PReLU with per-channel slope `alpha` (shape (C,) or (1,)); x is NCHW-like."""
    assert x.ndim >= 2, "PReLU with num_parameters>1 expects the channel dim at axis 1"
    N, C = x.shape[0], x.shape[1]
    if alpha.shape == (1,):                       # num_parameters=1 (shared slope)
        alpha = jnp.broadcast_to(alpha, (C,))
    assert alpha.shape == (C,)

    orig_shape = x.shape
    HW = 1
    for d in orig_shape[2:]:
        HW *= d

    alpha32 = alpha.astype(jnp.float32)
    itemsize = x.dtype.itemsize
    sub = max(8, 32 // itemsize)                  # f32: 8, bf16: 16, int8/fp8: 32
    tile_bytes, vmem_limit = _vmem_plan()

    if HW >= _LANE:
        # Lane-dense spatial layout: rows = N*C, lanes = H*W (free reshape).
        rows, lanes = N * C, HW
        x2 = x.reshape(rows, lanes)
        a2 = jnp.tile(alpha32, N).reshape(rows, 1)      # row r=(n,c) -> alpha[c]
        rb, lb = _pick_tiles(rows, lanes, itemsize, sub, tile_bytes)
        a_spec = pl.BlockSpec((rb, 1), lambda i, j: (i, 0))   # resident across j
    else:
        # Small spatial extent (HW < 128, incl. 2-D inputs): C*HW goes on lanes.
        rows, lanes = N, C * HW
        x2 = x.reshape(rows, lanes)
        a2 = jnp.repeat(alpha32, HW).reshape(1, lanes)  # lane l=c*HW+k -> alpha[c]
        rb, lb = _pick_tiles(rows, lanes, itemsize, sub, tile_bytes)
        a_spec = pl.BlockSpec((1, lb), lambda i, j: (0, j))

    grid = (pl.cdiv(rows, rb), pl.cdiv(lanes, lb))      # lane axis innermost

    cp_kwargs = dict(dimension_semantics=("parallel", "parallel"))
    if vmem_limit is not None:
        cp_kwargs["vmem_limit_bytes"] = vmem_limit

    out = pl.pallas_call(
        _prelu_kernel,
        out_shape=jax.ShapeDtypeStruct((rows, lanes), x.dtype),
        grid_spec=pltpu.PrefetchScalarGridSpec(
            num_scalar_prefetch=0,
            grid=grid,
            in_specs=[
                a_spec,                                         # per-row/lane alpha
                pl.BlockSpec((rb, lb), lambda i, j: (i, j)),    # x block
            ],
            out_specs=pl.BlockSpec((rb, lb), lambda i, j: (i, j)),
        ),
        compiler_params=pltpu.CompilerParams(**cp_kwargs),
    )(a2, x2)

    return out.reshape(orig_shape)


if __name__ == "__main__":
    key = jax.random.PRNGKey(0)
    alpha = jnp.array([0.25, 0.1, 0.5], dtype=jnp.float32)   # num_params=3

    def ref(x, a):
        shape = [1, a.shape[0]] + [1] * (x.ndim - 2)
        ab = a.reshape(shape)
        return jnp.where(x > 0, x, (ab * x.astype(jnp.float32)).astype(x.dtype))

    k1, k2, k3 = jax.random.split(key, 3)
    ok = True

    # Case A: lane-dense spatial layout (HW >= 128).
    x_a = jax.random.normal(k1, (2, 3, 16, 16), dtype=jnp.float32)
    y_a = jax.block_until_ready(prelu_pallas(x_a, alpha))
    assert y_a.shape == x_a.shape and y_a.dtype == x_a.dtype
    ok &= bool(jnp.allclose(y_a, ref(x_a, alpha), atol=1e-6, rtol=1e-6))

    # Case B: small spatial maps (HW < 128) -> C*HW placed on the lane axis.
    x_b = jax.random.normal(k2, (4, 3, 7, 7), dtype=jnp.float32)
    y_b = jax.block_until_ready(prelu_pallas(x_b, alpha))
    ok &= bool(jnp.allclose(y_b, ref(x_b, alpha), atol=1e-6, rtol=1e-6))

    # Case B, 2-D input (no spatial dims).
    x_c = jax.random.normal(k3, (8, 3), dtype=jnp.float32)
    y_c = jax.block_until_ready(prelu_pallas(x_c, alpha))
    ok &= bool(jnp.allclose(y_c, ref(x_c, alpha), atol=1e-6, rtol=1e-6))

    assert ok
    print("KERNEL_OK")
</pallas_src>

<mosaic_0001>
module attributes {stable_mosaic.version = 11 : i64} {
  func.func @_prelu_kernel(%arg0: i32, %arg1: i32, %arg2: memref<6x1xf32, #tpu.memory_space<vmem>>, %arg3: memref<6x128xf32, #tpu.memory_space<vmem>>, %arg4: memref<6x128xf32, #tpu.memory_space<vmem>>) attributes {dimension_semantics = [#tpu.dimension_semantics<parallel>, #tpu.dimension_semantics<parallel>], iteration_bounds = array<i64: 1, 2>, scalar_prefetch = 0 : i64, scratch_operands = 0 : i64, tpu.core_type = #tpu.core_type<tc>, window_params = [{transform_indices = @transform_0, window_bounds = array<i64: 6, 1>}, {transform_indices = @transform_1, window_bounds = array<i64: 6, 128>}, {transform_indices = @transform_2, window_bounds = array<i64: 6, 128>}]} {
    %c0 = arith.constant 0 : index
    %c0_0 = arith.constant 0 : index
    %0 = vector.load %arg3[%c0, %c0_0] : memref<6x128xf32, #tpu.memory_space<vmem>>, vector<6x128xf32>
    %c0_1 = arith.constant 0 : index
    %c0_2 = arith.constant 0 : index
    %1 = vector.load %arg2[%c0_1, %c0_2] : memref<6x1xf32, #tpu.memory_space<vmem>>, vector<6x1xf32>
    %2 = vector.broadcast %1 : vector<6x1xf32> to vector<6x128xf32>
    %3 = arith.mulf %2, %0 : vector<6x128xf32>
    %cst = arith.constant 0.000000e+00 : f32
    %4 = vector.broadcast %cst : f32 to vector<6x128xf32>
    %5 = arith.cmpf ogt, %0, %4 : vector<6x128xf32>
    %6 = arith.select %5, %0, %3 : vector<6x128xi1>, vector<6x128xf32>
    %c0_3 = arith.constant 0 : index
    %c0_4 = arith.constant 0 : index
    %7 = vector.load %arg4[%c0_3, %c0_4] : memref<6x128xf32, #tpu.memory_space<vmem>>, vector<6x128xf32>
    tpu.vector_store %arg4[%c0_3, %c0_4], %6 {strides = array<i32>} : memref<6x128xf32, #tpu.memory_space<vmem>>, vector<6x128xf32>,
    return
  }
  func.func @transform_0(%arg0: i32, %arg1: i32) -> (i32, i32) {
    %c0_i32 = arith.constant 0 : i32
    %c0_i32_0 = arith.constant 0 : i32
    return %arg0, %c0_i32 : i32, i32
  }
  func.func @transform_1(%arg0: i32, %arg1: i32) -> (i32, i32) {
    %c0_i32 = arith.constant 0 : i32
    return %arg0, %arg1 : i32, i32
  }
  func.func @transform_2(%arg0: i32, %arg1: i32) -> (i32, i32) {
    %c0_i32 = arith.constant 0 : i32
    return %arg0, %arg1 : i32, i32
  }
}

</mosaic_0001>

<llo_original>
// kernel: tpu_custom_call.1
$region0: #{tpu_custom_call.1}
  #allocation0 [shape = 'u32[]', space=smem, size = 0x4, offset = 0x4, fixed_abs, tag = 'smem constant byte address 0x4 - core index']
  #allocation1 [shape = 'u32[72,128]{1,0:T(1,128)}', space=vmem, size = 0x9000, scoped, tag = 'internal scratch']
  %s0 = inlined_call_operand.vmem [shape: f32[6,1], index: 0, kind: input, shape index: {}]
  %s1 = inlined_call_operand.hbm [shape: f32[6,256], index: 1, kind: input, shape index: {}]
  %s2 = inlined_call_operand.hbm [shape: f32[6,256], index: 2, kind: output, shape index: {}]
  %s3 = sld [smem:[#allocation0]]
  $region45: #{tpu_custom_call.1} parent=0
    _
  %s5 = ssub.s32 1, %s3
  %s6 = scalar_select 0, %s5, %s3
  $region1: #{tpu_custom_call.1} parent=0
    #allocation2 [shape = 'u8[8192]{0}', space=vmem, size = 0x2000, scoped, tag = 'input window, operand 1']
    #allocation3 [shape = 's32[2]{0}', space=sflag, size = 0x8, scoped, tag = 'scoped memory for tpu_custom_call.1']
    #allocation4 [shape = 's32[2]{0}', space=sflag, size = 0x8, scoped, tag = 'scoped memory for tpu_custom_call.1']
    #allocation5 [shape = 'u8[8192]{0}', space=vmem, size = 0x2000, scoped, tag = 'output window, operand 0']
    %7 = vsyncpa [#allocation3], 0
    %s8 = scalar_lea.sflag [#allocation3], 1
    %9 = vsyncpa %s8, 0
    %10 = vsyncpa [#allocation4], 0
    %s11 = scalar_lea.sflag [#allocation4], 1
    %12 = vsyncpa %s11, 0
    loop: start=0, step=1, limit=4
    $region2: #{tpu_custom_call.1} parent=1 // loop_pre_header
      _
    $region3: #{tpu_custom_call.1} parent=1 // loop_header
      %s14 = sphi 0, %s18
      %p15 = scmp.ge.s32.totalorder %s14, 4
      %s21 = sphi 0, %s33
      %s22 = sphi 0, %s29
      %s23 = sphi 0, %s21
      %s24 = sphi 0, %s22
      %s25 = sphi 0, %s23
      %s26 = sphi 0, %s24
      %s36 = sphi 0, %s38
      %s39 = sphi 0, %s36
      %s40 = sphi 0, %s39
      %s56 = sphi 0, %s40
      %s64 = sphi 0, %s66
      %s67 = sphi 0, %s64
      %s68 = sphi 0, %s67
      %s84 = sphi 0, %s68
      %s92 = sphi 0, %s94
      %s95 = sphi 0, %s92
      %s96 = sphi 0, %s95
      %s112 = sphi 0, %s96
    $region4: #{tpu_custom_call.1} parent=1 // loop_header_branch
      %17 = sbr.rel (%p15) target = $region8
    $region5: #{tpu_custom_call.1} parent=1 // loop_body
      %s19 = ssub.s32 %s14, 1
      %s20 = ssub.s32 %s14, 2
      %s27 = sadd.s32 1, %s22
      %p28 = scmp.ge.s32.totalorder %s27, 2
      %s29 = scalar_select %p28, 0, %s27
      %s30 = sadd.s32 1, %s21
      %s31 = scalar_select %p28, %s30, %s21
      %p32 = scmp.ge.s32.totalorder %s31, 1
      %s33 = scalar_select %p32, 0, %s31
      %s34 = ssub.s32 %s21, %s33
      %p35 = scmp.eq.s32.totalorder %s34, 0
      %s37 = sadd.s32 %s36, 1
      %s38 = scalar_select %p35, %s36, %s37
      %p41 = pneg %p35
      %p42 = scmp.eq.s32.totalorder %s14, 1
      %p43 = por %p41, %p42
      %p44 = scmp.ne.s32.totalorder %s36, %s39
      %p45 = scmp.eq.s32.totalorder %s14, 0
      %p46 = por %p44, %p45
      %p47 = scmp.ne.s32.totalorder %s36, %s39
      %p48 = scmp.eq.s32.totalorder %s19, 1
      %p49 = por %p47, %p48
      %p50 = scmp.ne.s32.totalorder %s39, %s40
      %p51 = scmp.eq.s32.totalorder %s19, 0
      %p52 = por %p50, %p51
      %p53 = scmp.ne.s32.totalorder %s39, %s40
      %p54 = scmp.eq.s32.totalorder %s20, 1
      %p55 = por %p53, %p54
      %p57 = scmp.ne.s32.totalorder %s40, %s56
      %p58 = scmp.eq.s32.totalorder %s20, 0
      %p59 = por %p57, %p58
      %s60 = ssub.s32 %s21, %s33
      %s61 = ssub.s32 %s22, %s29
      %s62 = sor.u32 %s60, %s61
      %p63 = scmp.eq.s32.totalorder %s62, 0
      %s65 = sadd.s32 %s64, 1
      %s66 = scalar_select %p63, %s64, %s65
      %p69 = pneg %p63
      %p70 = scmp.eq.s32.totalorder %s14, 1
      %p71 = por %p69, %p70
      %p72 = scmp.ne.s32.totalorder %s64, %s67
      %p73 = scmp.eq.s32.totalorder %s14, 0
      %p74 = por %p72, %p73
      %p75 = scmp.ne.s32.totalorder %s64, %s67
      %p76 = scmp.eq.s32.totalorder %s19, 1
      %p77 = por %p75, %p76
      %p78 = scmp.ne.s32.totalorder %s67, %s68
      %p79 = scmp.eq.s32.totalorder %s19, 0
      %p80 = por %p78, %p79
      %p81 = scmp.ne.s32.totalorder %s67, %s68
      %p82 = scmp.eq.s32.totalorder %s20, 1
      %p83 = por %p81, %p82
      %p85 = scmp.ne.s32.totalorder %s68, %s84
      %p86 = scmp.eq.s32.totalorder %s20, 0
      %p87 = por %p85, %p86
      %s88 = ssub.s32 %s21, %s33
      %s89 = ssub.s32 %s22, %s29
      %s90 = sor.u32 %s88, %s89
      %p91 = scmp.eq.s32.totalorder %s90, 0
      %s93 = sadd.s32 %s92, 1
      %s94 = scalar_select %p91, %s92, %s93
      %p97 = pneg %p91
      %p98 = scmp.eq.s32.totalorder %s14, 1
      %p99 = por %p97, %p98
      %p100 = scmp.ne.s32.totalorder %s92, %s95
      %p101 = scmp.eq.s32.totalorder %s14, 0
      %p102 = por %p100, %p101
      %p103 = scmp.ne.s32.totalorder %s92, %s95
      %p104 = scmp.eq.s32.totalorder %s19, 1
      %p105 = por %p103, %p104
      %p106 = scmp.ne.s32.totalorder %s95, %s96
      %p107 = scmp.eq.s32.totalorder %s19, 0
      %p108 = por %p106, %p107
      %p109 = scmp.ne.s32.totalorder %s95, %s96
      %p110 = scmp.eq.s32.totalorder %s20, 1
      %p111 = por %p109, %p110
      %p113 = scmp.ne.s32.totalorder %s96, %s112
      %p114 = scmp.eq.s32.totalorder %s20, 0
      %p115 = por %p113, %p114
      %p116 = scmp.le.s32.totalorder 1, %s14
      %p117 = scmp.lt.s32.totalorder %s14, 3
      %p118 = pnand %p116, %p117
      %p119 = pneg %p118
      // Predicated region
      $region9: #{tpu_custom_call.1} parent=5 // pred_check
        _
      $region10: #{tpu_custom_call.1} parent=5 // pred_check_branch
        %121 = sbr.rel (%p118) target = $region12
      $region11: #{tpu_custom_call.1} parent=5 // pred_region
        %s122 = ssub.s32 %s14, 1
        // Predicated region
        $region13: #{tpu_custom_call.1} parent=11 // pred_check
          %p123 = pneg %p52
        $region14: #{tpu_custom_call.1} parent=11 // pred_check_branch
          %125 = sbr.rel (%p123) target = $region16
        $region15: #{tpu_custom_call.1} parent=11 // pred_region
          %p126 = scmp.lt.s32.totalorder %s23, 0
          %s127 = scalar_select %p126, %s23, 0
          %s128 = smul.addr %s127, 8
          %s129 = scalar_lea.vmem %s0, %s128
        $region16: #{tpu_custom_call.1} parent=11 // pred_fallthru
          _
      $region12: #{tpu_custom_call.1} parent=5 // pred_fallthru
        _
      %p130 = scmp.lt.s32.totalorder %s14, 2
      // Predicated region
      $region17: #{tpu_custom_call.1} parent=5 // pred_check
        %p131 = pneg %p130
      $region18: #{tpu_custom_call.1} parent=5 // pred_check_branch
        %133 = sbr.rel (%p131) target = $region20
      $region19: #{tpu_custom_call.1} parent=5 // pred_region
        // Predicated region
        $region21: #{tpu_custom_call.1} parent=19 // pred_check
          %p134 = pneg %p74
        $region22: #{tpu_custom_call.1} parent=19 // pred_check_branch
          %136 = sbr.rel (%p134) target = $region24
        $region23: #{tpu_custom_call.1} parent=19 // pred_region
          %s137 = sand.u32 %s64, 1
          %s138 = scalar_lea.sflag [#allocation3], %s137
          %s139 = sand.u32 %s64, 1
          %s140 = smul.addr %s139, 8
          %s141 = scalar_lea.vmem [#allocation2], %s140
          %143 = vsyncadd %s138, 0
          %s144 = smul.addr %s21, 2
          %s145 = sadd.s32 %s22, %s144
          %s146 = smul.addr %s145, 8
          %s147 = scalar_lea.hbm %s1, %s146
          %s149 = sshll.u32 %s147, 4
          %s150 = int_to_ptr.hbm [resolvable:$true] %s149
          %s151 = sshll.u32 %s141, 4
          %s152 = int_to_ptr.vmem [resolvable:$true] %s151
          %154 = dma.hbm_to_vmem [thread:$0]  %s150, 128, %s152, %s138
        $region24: #{tpu_custom_call.1} parent=19 // pred_fallthru
          _
      $region20: #{tpu_custom_call.1} parent=5 // pred_fallthru
        _
      %p155 = scmp.le.s32.totalorder 1, %s14
      %p156 = scmp.lt.s32.totalorder %s14, 3
      %p157 = pnand %p155, %p156
      %p158 = pneg %p157
      // Predicated region
      $region25: #{tpu_custom_call.1} parent=5 // pred_check
        _
      $region26: #{tpu_custom_call.1} parent=5 // pred_check_branch
        %160 = sbr.rel (%p157) target = $region28
      $region27: #{tpu_custom_call.1} parent=5 // pred_region
        %s161 = ssub.s32 %s14, 1
        %s162 = sand.u32 %s67, 1
        %s163 = scalar_lea.sflag [#allocation3], %s162
        %s164 = sand.u32 %s67, 1
        %s165 = smul.addr %s164, 8
        %s166 = scalar_lea.vmem [#allocation2], %s165
        // Predicated region
        $region29: #{tpu_custom_call.1} parent=27 // pred_check
          %p167 = pneg %p80
        $region30: #{tpu_custom_call.1} parent=27 // pred_check_branch
          %169 = sbr.rel (%p167) target = $region32
        $region31: #{tpu_custom_call.1} parent=27 // pred_region
          %171 = dma.done %s163, 128
        $region32: #{tpu_custom_call.1} parent=27 // pred_fallthru
          _
        %p172 = scmp.lt.s32.totalorder %s23, 0
        %s173 = scalar_select %p172, %s23, 0
        %s174 = smul.addr %s173, 8
        %s175 = scalar_lea.vmem %s0, %s174
        %p176 = pneg %p52
        %p177 = pneg %p49
        %s178 = sand.u32 %s67, 1
        %s179 = scalar_lea.sflag [#allocation3], %s178
        %s180 = sand.u32 %s67, 1
        %s181 = smul.addr %s180, 8
        %s182 = scalar_lea.vmem [#allocation2], %s181
        %p183 = pneg %p80
        %p184 = pneg %p77
        %p185 = pneg %p108
        %p186 = pneg %p105
        %s187 = sand.u32 %s95, 1
        %s188 = scalar_lea.sflag [#allocation4], %s187
        %s189 = sand.u32 %s95, 1
        %s190 = smul.addr %s189, 8
        %s191 = scalar_lea.vmem [#allocation5], %s190
        %p192 = scmp.lt.s32.totalorder %s23, 0
        %s193 = scalar_select %p192, %s23, 0
        %s194 = smul.addr %s193, 8
        %s195 = scalar_lea.vmem %s0, %s194
        %v196 = vld [vmem:[%s166] sm:$0x3f]
        %v197 = vld [vmem:[%s195] sm:$0x3f]
        %199 = vset.pattern.permute.xlu0 0
        %200 = vperm.xlu0 %199, %v197
        %v201 = vpop.permute.xlu0 %200
        %v203 = vmul.f32 %v201, %v196
        %vm204 = vcmp.gt.f32.partialorder %v196, 0.0
        %v205 = vsel %vm204, %v196, %v203
        %206 = vst [vmem:[%s191] sm:$0x3f] %v205
        %s207 = sand.u32 %s95, 1
        %s208 = scalar_lea.sflag [#allocation4], %s207
        %s209 = sand.u32 %s95, 1
        %s210 = smul.addr %s209, 8
        %s211 = scalar_lea.vmem [#allocation5], %s210
        // Predicated region
        $region33: #{tpu_custom_call.1} parent=27 // pred_check
          %p212 = pneg %p105
        $region34: #{tpu_custom_call.1} parent=27 // pred_check_branch
          %214 = sbr.rel (%p212) target = $region36
        $region35: #{tpu_custom_call.1} parent=27 // pred_region
          %216 = vsyncadd %s208, 0
          %s217 = smul.addr %s23, 2
          %s218 = sadd.s32 %s24, %s217
          %s219 = smul.addr %s218, 8
          %s220 = scalar_lea.hbm %s2, %s219
          %s222 = sshll.u32 %s211, 4
          %s223 = int_to_ptr.vmem [resolvable:$true] %s222
          %s224 = sshll.u32 %s220, 4
          %s225 = int_to_ptr.hbm [resolvable:$true] %s224
          %227 = dma.vmem_to_hbm [thread:$0]  %s223, 128, %s225, %s208
        $region36: #{tpu_custom_call.1} parent=27 // pred_fallthru
          _
      $region28: #{tpu_custom_call.1} parent=5 // pred_fallthru
        _
      %p228 = scmp.le.s32.totalorder 2, %s14
      // Predicated region
      $region37: #{tpu_custom_call.1} parent=5 // pred_check
        %p229 = pneg %p228
      $region38: #{tpu_custom_call.1} parent=5 // pred_check_branch
        %231 = sbr.rel (%p229) target = $region40
      $region39: #{tpu_custom_call.1} parent=5 // pred_region
        %s232 = ssub.s32 %s14, 2
        // Predicated region
        $region41: #{tpu_custom_call.1} parent=39 // pred_check
          %p233 = pneg %p111
        $region42: #{tpu_custom_call.1} parent=39 // pred_check_branch
          %235 = sbr.rel (%p233) target = $region44
        $region43: #{tpu_custom_call.1} parent=39 // pred_region
          %s236 = sand.u32 %s96, 1
          %s237 = scalar_lea.sflag [#allocation4], %s236
          %s238 = sand.u32 %s96, 1
          %s239 = smul.addr %s238, 8
          %s240 = scalar_lea.vmem [#allocation5], %s239
          %242 = dma.done %s237, 128
        $region44: #{tpu_custom_call.1} parent=39 // pred_fallthru
          _
      $region40: #{tpu_custom_call.1} parent=5 // pred_fallthru
        _
    $region6: #{tpu_custom_call.1} parent=1 // loop_footer
      %s18 = sadd.s32 1, %s14
    $region7: #{tpu_custom_call.1} parent=1 // loop_footer_branch
      %13 = sbr.rel target = $region3
    $region8: #{tpu_custom_call.1} parent=1 // loop_exit
      _
    %243 = vsyncpa [#allocation3], 1
    %s244 = scalar_lea.sflag [#allocation3], 1
    %245 = vsyncpa %s244, 1
    %246 = vsyncpa [#allocation4], 1
    %s247 = scalar_lea.sflag [#allocation4], 1
    %248 = vsyncpa %s247, 1

</llo_original>
